<compile_context>
chip_gen: v6e
topology: v6e:2x2x1
jax: 0.10.0
libtpu: 0.0.40
codegen_flags: <defaults>
</compile_context>

<pallas_src>
import numpy as np
import jax
import jax.numpy as jnp
from jax.experimental import pallas as pl
from jax.experimental.pallas import tpu as pltpu

NEG_INF = -1e9
NUM_TYPE = 4 * 9  # fixed by the module


def _round_up(v, m):
    return ((v + m - 1) // m) * m


def _pipool_kernel(x_ref, cid_ref, w1_ref, b1_ref, w2_ref, out_ref):
    # x_ref  : [TILE_N, FIN]   bf16   flattened bond features for this tile
    # cid_ref: [TILE_N, 1]     i32    combined id  graph*T + type  (-1 = padding)
    # w1_ref : [FIN, H_pad]    bf16 ; b1_ref: [1, H_pad] f32
    # w2_ref : [1, H_pad]      f32    fc_2 weight as a row (padded lanes are 0)
    # out_ref: [8, BT_pad]     f32    row 0 = partial pooled fc_2 scores of this split
    step = pl.program_id(1)

    @pl.when(step == 0)
    def _init():
        out_ref[...] = jnp.zeros_like(out_ref)

    # fc_1 + relu on this bond tile (bf16 MXU matmul, f32 accumulate).
    h = jnp.dot(x_ref[...], w1_ref[...], preferred_element_type=jnp.float32)
    h = jnp.maximum(h + b1_ref[...], 0.0)                       # [TILE_N, H_pad] f32

    # fc_2 per bond (linear -> commutes with the segment-sum pool): lane reduce.
    s = jnp.sum(h * w2_ref[...], axis=1, keepdims=True)          # [TILE_N, 1] f32

    # Segment-sum pool by combined (graph, type) id: select the bond score into its
    # column and reduce over the bond (sublane) axis.  Padding bonds (cid = -1)
    # never match, so padded rows of x contribute nothing.  Pure f32, no MXU.
    bt_pad = out_ref.shape[1]
    col_id = jax.lax.broadcasted_iota(jnp.int32, (1, bt_pad), 1)  # tiny iota, broadcasts
    prod = jnp.where(cid_ref[...] == col_id, s, 0.0)              # [TILE_N, BT_pad]
    contrib = jnp.sum(prod, axis=0, keepdims=True)                # [1, BT_pad]
    out_ref[0:1, :] = out_ref[0:1, :] + contrib


def pipool_pallas(x_pad, cid_col, w1p, b1p, w2r, *, tile_n, n_split,
                  tiles_per_split, bt_pad):
    n_pad, fin = x_pad.shape
    h_pad = w1p.shape[1]
    return pl.pallas_call(
        _pipool_kernel,
        out_shape=jax.ShapeDtypeStruct((n_split * 8, bt_pad), jnp.float32),
        grid=(n_split, tiles_per_split),
        in_specs=[
            pl.BlockSpec((tile_n, fin), lambda c, i: (c * tiles_per_split + i, 0)),
            pl.BlockSpec((tile_n, 1), lambda c, i: (c * tiles_per_split + i, 0)),
            pl.BlockSpec((fin, h_pad), lambda c, i: (0, 0)),
            pl.BlockSpec((1, h_pad), lambda c, i: (0, 0)),
            pl.BlockSpec((1, h_pad), lambda c, i: (0, 0)),
        ],
        out_specs=pl.BlockSpec((8, bt_pad), lambda c, i: (c, 0)),
        compiler_params=pltpu.CompilerParams(
            dimension_semantics=("parallel", "arbitrary")),
    )(x_pad, cid_col, w1p, b1p, w2r)


def pipool_forward(bond_types_batch, type_count_batch, bond_feat, params,
                   *, bond_dim, num_angle, num_type=NUM_TYPE, tile_n=1024,
                   n_split=None):
    """Glue: id derivation, padding, dtype prep, kernel call, one-shot epilogue."""
    w1, b1, w2, b2 = params
    batch_size = type_count_batch.shape[0] // num_type
    counts_bt = type_count_batch.reshape(batch_size, num_type).astype(jnp.int32)

    n = bond_feat.shape[0]
    fin = num_angle * bond_dim

    if n == 0:
        # No bonds: pooled sums are all zero (counts should be zero too -> masked).
        pooled_flat = jnp.zeros((batch_size * num_type,), jnp.float32)
        gids = jnp.zeros((0,), jnp.int32)
        tids = jnp.zeros((0,), jnp.int32)
    else:
        x_flat = bond_feat.reshape(n, fin)
        tids = bond_types_batch.astype(jnp.int32)                        # [N]

        # rank within type via one stable sort (no [N, B] / [N, T] blow-up).
        per_type_total = jnp.zeros((num_type,), jnp.int32).at[tids].add(1)
        type_start = jnp.concatenate(
            [jnp.zeros((1,), jnp.int32),
             jnp.cumsum(per_type_total)[:-1].astype(jnp.int32)])
        order = jnp.argsort(tids, stable=True)
        rank = jnp.zeros((n,), jnp.int32).at[order].set(
            jnp.arange(n, dtype=jnp.int32) - type_start[tids[order]])

        # graph id via ONE searchsorted into a type-major boundary array.
        # (int32 math; fine while num_type*(n+1) < 2^31.)
        cum = jnp.cumsum(counts_bt, axis=0).astype(jnp.int32)            # [B, T]
        big = jnp.int32(n + 1)
        bounds = (jnp.arange(num_type, dtype=jnp.int32)[:, None] * big +
                  cum.T).reshape(-1)                                     # [T*B], sorted
        q = tids * big + rank
        gids = (jnp.searchsorted(bounds, q, side="right") -
                tids * batch_size).astype(jnp.int32)
        cids = gids * num_type + tids                                    # [N]

        # Tiling: big bond tiles (amortize grid overhead), clamped only when N is
        # itself small; optional 2-way split of the reduction for v7x's 2 TCs.
        tile_n = max(128, min(tile_n, _round_up(n, 128)))
        n_tiles = -(-n // tile_n)
        if n_split is None:
            n_split = 2 if n_tiles >= 2 else 1
        tiles_per_split = -(-n_tiles // n_split)
        n_pad = n_split * tiles_per_split * tile_n
        pad = n_pad - n

        x_pad = jnp.pad(x_flat, ((0, pad), (0, 0))).astype(jnp.bfloat16)  # stream bf16
        cid_col = jnp.pad(cids, (0, pad), constant_values=-1).reshape(n_pad, 1)

        # Zero-pad the hidden dim to 128 so h is lane-dense.
        hid = w1.shape[1]
        h_pad_dim = _round_up(max(hid, 128), 128)
        w1p = jnp.pad(w1, ((0, 0), (0, h_pad_dim - hid))).astype(jnp.bfloat16)
        b1p = jnp.pad(b1.reshape(1, hid),
                      ((0, 0), (0, h_pad_dim - hid))).astype(jnp.float32)
        w2r = jnp.pad(w2.reshape(1, hid),
                      ((0, 0), (0, h_pad_dim - hid))).astype(jnp.float32)

        bt_pad = _round_up(batch_size * num_type, 128)
        out_partial = pipool_pallas(
            x_pad, cid_col, w1p, b1p, w2r, tile_n=tile_n, n_split=n_split,
            tiles_per_split=tiles_per_split, bt_pad=bt_pad)
        pooled_flat = out_partial.sum(axis=0)[: batch_size * num_type]   # [B*T]

    # One-shot epilogue in plain XLA (cheap, keeps the kernel output lane-dense).
    b2s = jnp.asarray(b2, jnp.float32).reshape(-1)[0]
    scores = pooled_flat.reshape(batch_size, num_type) + b2s
    scores = jnp.where(counts_bt > 0, scores, NEG_INF)
    probs = jax.nn.softmax(scores, axis=1)
    return probs, (gids, tids, counts_bt)


def _glorot(key, shape):
    fan_in, fan_out = shape
    lim = float(np.sqrt(6.0 / (fan_in + fan_out)))
    return jax.random.uniform(key, shape, jnp.float32, -lim, lim)


if __name__ == "__main__":
    bond_dim, hidden_dim, num_angle = 16, 32, 4
    batch_size = 2
    fc_in_dim = num_angle * bond_dim

    key = jax.random.PRNGKey(0)
    k_feat, k_w1, k_b1, k_w2, k_b2 = jax.random.split(key, 5)

    # Deterministic per-(graph, type) bond counts in {0..4} -> 141 bonds total;
    # several (graph, type) cells are empty so the -1e9 mask path is exercised.
    counts_np = (np.arange(batch_size * NUM_TYPE) % 5).reshape(batch_size, NUM_TYPE)
    type_count_batch = jnp.asarray(counts_np.reshape(-1), dtype=jnp.int32)   # [72]
    # bond_types_batch: graphs concatenated; within a graph, bonds sorted by type.
    bond_types_np = np.concatenate(
        [np.repeat(np.arange(NUM_TYPE), counts_np[b]) for b in range(batch_size)]
    ).astype(np.int32)
    bond_types_batch = jnp.asarray(bond_types_np)                            # [141]
    num_bonds = int(bond_types_np.shape[0])

    bond_feat = jax.random.normal(k_feat, (num_bonds, num_angle, bond_dim),
                                  dtype=jnp.float32)                         # [141,4,16]

    # fc_1: Linear(64, 32) + relu ; fc_2: Linear(32, 1)
    w1 = _glorot(k_w1, (fc_in_dim, hidden_dim))
    b1 = jax.random.uniform(k_b1, (1, hidden_dim), jnp.float32, -0.05, 0.05)
    w2 = _glorot(k_w2, (hidden_dim, 1))
    b2 = jax.random.uniform(k_b2, (1, 1), jnp.float32, -0.05, 0.05)
    params = (w1, b1, w2, b2)

    # Config sweep: default (one big tile), forced 2-way parallel split (1 step per
    # split), and forced single-split 2-step reduction (exercises accumulation).
    configs = [dict(), dict(tile_n=128), dict(tile_n=128, n_split=1)]

    ref = None
    for cfg in configs:
        out, (gids, tids, counts_bt) = pipool_forward(
            bond_types_batch, type_count_batch, bond_feat, params,
            bond_dim=bond_dim, num_angle=num_angle, **cfg)
        out = jax.block_until_ready(out)
        assert out.shape == (batch_size, NUM_TYPE)

        if ref is None:
            # Pure-JAX reference with the same semantics (full f32, HIGHEST precision).
            x_flat = bond_feat.reshape(num_bonds, fc_in_dim)
            h_ref = jax.nn.relu(
                jnp.dot(x_flat, w1, precision=jax.lax.Precision.HIGHEST) + b1)
            s_ref = jnp.dot(h_ref, w2, precision=jax.lax.Precision.HIGHEST)[:, 0]
            sc_ref = jnp.zeros((batch_size, NUM_TYPE),
                               jnp.float32).at[gids, tids].add(s_ref)
            sc_ref = sc_ref + b2[0, 0]
            sc_ref = jnp.where(counts_bt > 0, sc_ref, NEG_INF)
            ref = jax.nn.softmax(sc_ref, axis=1)

        # bf16-streamed x / w1 vs f32 HIGHEST reference -> modest tolerance.
        np.testing.assert_allclose(np.asarray(out), np.asarray(ref),
                                   atol=2e-2, rtol=2e-2)
        np.testing.assert_allclose(np.asarray(out).sum(axis=1), 1.0, atol=1e-4)

    print("KERNEL_OK")
</pallas_src>

<mosaic_0001>
module attributes {stable_mosaic.version = 11 : i64} {
  func.func @_pipool_kernel(%arg0: i32, %arg1: i32, %arg2: memref<256x64xbf16, #tpu.memory_space<vmem>>, %arg3: memref<256x1xi32, #tpu.memory_space<vmem>>, %arg4: memref<64x128xbf16, #tpu.memory_space<vmem>>, %arg5: memref<1x128xf32, #tpu.memory_space<vmem>>, %arg6: memref<1x128xf32, #tpu.memory_space<vmem>>, %arg7: memref<8x128xf32, #tpu.memory_space<vmem>>) attributes {dimension_semantics = [#tpu.dimension_semantics<parallel>, #tpu.dimension_semantics<arbitrary>], iteration_bounds = array<i64: 1, 1>, scalar_prefetch = 0 : i64, scratch_operands = 0 : i64, tpu.core_type = #tpu.core_type<tc>, window_params = [{transform_indices = @transform_0, window_bounds = array<i64: 256, 64>}, {transform_indices = @transform_1, window_bounds = array<i64: 256, 1>}, {pipeline_mode = #tpu.pipeline_mode<synchronous>, transform_indices = @transform_2, window_bounds = array<i64: 64, 128>}, {pipeline_mode = #tpu.pipeline_mode<synchronous>, transform_indices = @transform_3, window_bounds = array<i64: 1, 128>}, {pipeline_mode = #tpu.pipeline_mode<synchronous>, transform_indices = @transform_4, window_bounds = array<i64: 1, 128>}, {transform_indices = @transform_5, window_bounds = array<i64: 8, 128>}]} {
    %c0_i32 = arith.constant 0 : i32
    %0 = arith.cmpi eq, %arg1, %c0_i32 : i32
    %1 = arith.extui %0 : i1 to i32
    %c0_i32_0 = arith.constant 0 : i32
    %2 = arith.cmpi ne, %1, %c0_i32_0 : i32
    scf.if %2 {
      %cst_18 = arith.constant 0.000000e+00 : f32
      %30 = vector.broadcast %cst_18 : f32 to vector<8x128xf32>
      %c0_19 = arith.constant 0 : index
      %c0_20 = arith.constant 0 : index
      %31 = vector.load %arg7[%c0_19, %c0_20] : memref<8x128xf32, #tpu.memory_space<vmem>>, vector<8x128xf32>
      tpu.vector_store %arg7[%c0_19, %c0_20], %30 {strides = array<i32>} : memref<8x128xf32, #tpu.memory_space<vmem>>, vector<8x128xf32>,
    } else {
    }
    %c0 = arith.constant 0 : index
    %c0_1 = arith.constant 0 : index
    %3 = vector.load %arg2[%c0, %c0_1] : memref<256x64xbf16, #tpu.memory_space<vmem>>, vector<256x64xbf16>
    %c0_2 = arith.constant 0 : index
    %c0_3 = arith.constant 0 : index
    %4 = vector.load %arg4[%c0_2, %c0_3] : memref<64x128xbf16, #tpu.memory_space<vmem>>, vector<64x128xbf16>
    %cst = arith.constant dense<0.000000e+00> : vector<256x128xf32>
    %5 = tpu.matmul %3, %4, %cst {dimension_numbers = #tpu.dot_dimension_numbers<[1], [0], [0], [1], [0, 0, 1, 1], [], []>} : vector<256x64xbf16>, vector<64x128xbf16>, vector<256x128xf32> -> vector<256x128xf32>
    %c0_4 = arith.constant 0 : index
    %c0_5 = arith.constant 0 : index
    %6 = vector.load %arg5[%c0_4, %c0_5] : memref<1x128xf32, #tpu.memory_space<vmem>>, vector<1x128xf32>
    %7 = vector.broadcast %6 : vector<1x128xf32> to vector<256x128xf32>
    %8 = arith.addf %5, %7 : vector<256x128xf32>
    %cst_6 = arith.constant 0.000000e+00 : f32
    %9 = vector.broadcast %cst_6 : f32 to vector<256x128xf32>
    %10 = arith.maximumf %8, %9 : vector<256x128xf32>
    %c0_7 = arith.constant 0 : index
    %c0_8 = arith.constant 0 : index
    %11 = vector.load %arg6[%c0_7, %c0_8] : memref<1x128xf32, #tpu.memory_space<vmem>>, vector<1x128xf32>
    %12 = vector.broadcast %11 : vector<1x128xf32> to vector<256x128xf32>
    %13 = arith.mulf %10, %12 : vector<256x128xf32>
    %cst_9 = arith.constant dense<0.000000e+00> : vector<256xf32>
    %14 = vector.multi_reduction <add>, %13, %cst_9 [1] : vector<256x128xf32> to vector<256xf32>
    %15 = vector.shape_cast %14 : vector<256xf32> to vector<256x1xf32>
    %16 = tpu.iota {dimensions = array<i32: 1>} : vector<1x128xi32>
    %c0_10 = arith.constant 0 : index
    %c0_11 = arith.constant 0 : index
    %17 = vector.load %arg3[%c0_10, %c0_11] : memref<256x1xi32, #tpu.memory_space<vmem>>, vector<256x1xi32>
    %18 = vector.broadcast %17 : vector<256x1xi32> to vector<256x128xi32>
    %19 = vector.broadcast %16 : vector<1x128xi32> to vector<256x128xi32>
    %20 = arith.cmpi eq, %18, %19 : vector<256x128xi32>
    %cst_12 = arith.constant 0.000000e+00 : f32
    %21 = vector.shape_cast %15 : vector<256x1xf32> to vector<256x1xf32>
    %22 = vector.broadcast %21 : vector<256x1xf32> to vector<256x128xf32>
    %23 = vector.broadcast %cst_12 : f32 to vector<256x128xf32>
    %24 = arith.select %20, %22, %23 : vector<256x128xi1>, vector<256x128xf32>
    %cst_13 = arith.constant dense<0.000000e+00> : vector<128xf32>
    %25 = vector.multi_reduction <add>, %24, %cst_13 [0] : vector<256x128xf32> to vector<128xf32>
    %26 = vector.shape_cast %25 : vector<128xf32> to vector<1x128xf32>
    %c0_14 = arith.constant 0 : index
    %c0_15 = arith.constant 0 : index
    %27 = vector.load %arg7[%c0_14, %c0_15] : memref<8x128xf32, #tpu.memory_space<vmem>>, vector<1x128xf32>
    %28 = arith.addf %27, %26 : vector<1x128xf32>
    %c0_16 = arith.constant 0 : index
    %c0_17 = arith.constant 0 : index
    %29 = vector.load %arg7[%c0_16, %c0_17] : memref<8x128xf32, #tpu.memory_space<vmem>>, vector<1x128xf32>
    tpu.vector_store %arg7[%c0_16, %c0_17], %28 {strides = array<i32>} : memref<8x128xf32, #tpu.memory_space<vmem>>, vector<1x128xf32>,
    return
  }
  func.func @transform_0(%arg0: i32, %arg1: i32) -> (i32, i32) {
    %c1_i32 = arith.constant 1 : i32
    %0 = arith.muli %arg0, %c1_i32 : i32
    %1 = arith.addi %0, %arg1 : i32
    %c0_i32 = arith.constant 0 : i32
    %c0_i32_0 = arith.constant 0 : i32
    return %1, %c0_i32 : i32, i32
  }
  func.func @transform_1(%arg0: i32, %arg1: i32) -> (i32, i32) {
    %c1_i32 = arith.constant 1 : i32
    %0 = arith.muli %arg0, %c1_i32 : i32
    %1 = arith.addi %0, %arg1 : i32
    %c0_i32 = arith.constant 0 : i32
    %c0_i32_0 = arith.constant 0 : i32
    return %1, %c0_i32 : i32, i32
  }
  func.func @transform_2(%arg0: i32, %arg1: i32) -> (i32, i32) {
    %c0_i32 = arith.constant 0 : i32
    %c0_i32_0 = arith.constant 0 : i32
    %c0_i32_1 = arith.constant 0 : i32
    return %c0_i32, %c0_i32_0 : i32, i32
  }
  func.func @transform_3(%arg0: i32, %arg1: i32) -> (i32, i32) {
    %c0_i32 = arith.constant 0 : i32
    %c0_i32_0 = arith.constant 0 : i32
    %c0_i32_1 = arith.constant 0 : i32
    return %c0_i32, %c0_i32_0 : i32, i32
  }
  func.func @transform_4(%arg0: i32, %arg1: i32) -> (i32, i32) {
    %c0_i32 = arith.constant 0 : i32
    %c0_i32_0 = arith.constant 0 : i32
    %c0_i32_1 = arith.constant 0 : i32
    return %c0_i32, %c0_i32_0 : i32, i32
  }
  func.func @transform_5(%arg0: i32, %arg1: i32) -> (i32, i32) {
    %c0_i32 = arith.constant 0 : i32
    %c0_i32_0 = arith.constant 0 : i32
    return %arg0, %c0_i32 : i32, i32
  }
}

</mosaic_0001>

<llo_original>
// kernel: tpu_custom_call.1
$region0: #{tpu_custom_call.1}
  #allocation0 [shape = 'u32[]', space=smem, size = 0x4, offset = 0x4, fixed_abs, tag = 'smem constant byte address 0x4 - core index']
  #allocation1 [shape = 'u32[144,128]{1,0:T(1,128)}', space=vmem, size = 0x12000, scoped, tag = 'internal scratch']
  %s0 = inlined_call_operand.vmem [shape: bf16[256,64], index: 0, kind: input, shape index: {}]
  %s1 = inlined_call_operand.vmem [shape: s32[256,1], index: 1, kind: input, shape index: {}]
  %s2 = inlined_call_operand.vmem [shape: bf16[64,128], index: 2, kind: input, shape index: {}]
  %s3 = inlined_call_operand.vmem [shape: f32[1,128], index: 3, kind: input, shape index: {}]
  %s4 = inlined_call_operand.vmem [shape: f32[1,128], index: 4, kind: input, shape index: {}]
  %s5 = inlined_call_operand.hbm [shape: f32[8,128], index: 5, kind: output, shape index: {}]
  %s6 = sld [smem:[#allocation0]]
  $region34: #{tpu_custom_call.1} parent=0
    _
  %s8 = ssub.s32 1, %s6
  %s9 = scalar_select 0, %s8, %s6
  $region1: #{tpu_custom_call.1} parent=0
    #allocation2 [shape = 'u8[4096]{0}', space=vmem, size = 0x1000, scoped, tag = 'output window, operand 0, single buffered']
    #allocation3 [shape = 's32[1]{0}', space=sflag, size = 0x4, scoped, tag = 'scoped memory for tpu_custom_call.1']
    %10 = vsyncpa [#allocation3], 0
    // Predicated region
    $region2: #{tpu_custom_call.1} parent=1 // pred_check
      _
    $region3: #{tpu_custom_call.1} parent=1 // pred_check_branch
      %12 = sbr.rel (0) target = $region5
    $region4: #{tpu_custom_call.1} parent=1 // pred_region
      %s13 = sadd.s32 0, 0
      %s14 = smul.u32 32, %s13
      %p15 = scmp.lt.s32.totalorder %s14, 31
      %s16 = scalar_select %p15, %s14, 31
      %s17 = smul.addr %s16, 4
      %s18 = scalar_lea.vmem %s0, %s17
      %s19 = sadd.s32 0, 0
      %s20 = smul.u32 32, %s19
    $region5: #{tpu_custom_call.1} parent=1 // pred_fallthru
      _
    // Predicated region
    $region6: #{tpu_custom_call.1} parent=1 // pred_check
      _
    $region7: #{tpu_custom_call.1} parent=1 // pred_check_branch
      %22 = sbr.rel (0) target = $region9
    $region8: #{tpu_custom_call.1} parent=1 // pred_region
      %s23 = sadd.s32 0, 0
      %s24 = smul.u32 32, %s23
      %p25 = scmp.lt.s32.totalorder %s24, 31
      %s26 = scalar_select %p25, %s24, 31
      %s27 = smul.addr %s26, 8
      %s28 = scalar_lea.vmem %s1, %s27
      %s29 = sadd.s32 0, 0
      %s30 = smul.u32 32, %s29
    $region9: #{tpu_custom_call.1} parent=1 // pred_fallthru
      _
    // Predicated region
    $region10: #{tpu_custom_call.1} parent=1 // pred_check
      _
    $region11: #{tpu_custom_call.1} parent=1 // pred_check_branch
      %32 = sbr.rel (0) target = $region13
    $region12: #{tpu_custom_call.1} parent=1 // pred_region
      _
    $region13: #{tpu_custom_call.1} parent=1 // pred_fallthru
      _
    // Predicated region
    $region14: #{tpu_custom_call.1} parent=1 // pred_check
      _
    $region15: #{tpu_custom_call.1} parent=1 // pred_check_branch
      %34 = sbr.rel (0) target = $region17
    $region16: #{tpu_custom_call.1} parent=1 // pred_region
      _
    $region17: #{tpu_custom_call.1} parent=1 // pred_fallthru
      _
    // Predicated region
    $region18: #{tpu_custom_call.1} parent=1 // pred_check
      _
    $region19: #{tpu_custom_call.1} parent=1 // pred_check_branch
      %36 = sbr.rel (0) target = $region21
    $region20: #{tpu_custom_call.1} parent=1 // pred_region
      _
    $region21: #{tpu_custom_call.1} parent=1 // pred_fallthru
      _
    %s37 = sadd.s32 0, 0
    %s38 = smul.u32 32, %s37
    %p39 = scmp.lt.s32.totalorder %s38, 31
    %s40 = scalar_select %p39, %s38, 31
    %s41 = smul.addr %s40, 4
    %s42 = scalar_lea.vmem %s0, %s41
    %s43 = sadd.s32 0, 0
    %s44 = smul.u32 32, %s43
    %p45 = scmp.lt.s32.totalorder %s44, 31
    %s46 = scalar_select %p45, %s44, 31
    %s47 = smul.addr %s46, 8
    %s48 = scalar_lea.vmem %s1, %s47
    %s49 = sadd.s32 0, 0
    %s50 = smul.u32 32, %s49
    %p51 = scmp.lt.s32.totalorder %s50, 31
    %s52 = scalar_select %p51, %s50, 31
    %s53 = smul.addr %s52, 4
    %s54 = scalar_lea.vmem %s0, %s53
    %s55 = sadd.s32 0, 0
    %s56 = smul.u32 32, %s55
    %s57 = sadd.s32 0, 0
    %s58 = smul.u32 32, %s57
    %p59 = scmp.lt.s32.totalorder %s58, 31
    %s60 = scalar_select %p59, %s58, 31
    %s61 = smul.addr %s60, 8
    %s62 = scalar_lea.vmem %s1, %s61
    %s63 = sadd.s32 0, 0
    %s64 = smul.u32 32, %s63
    %p66 = scmp.eq.s32.totalorder 0, 0
    // Predicated region
    $region22: #{tpu_custom_call.1} parent=1 // pred_check
      %p67 = pneg %p66
    $region23: #{tpu_custom_call.1} parent=1 // pred_check_branch
      %69 = sbr.rel (%p67) target = $region25
    $region24: #{tpu_custom_call.1} parent=1 // pred_region
      %70 = vst [vmem:[#allocation2] sm:$0xff] 0.0
    $region25: #{tpu_custom_call.1} parent=1 // pred_fallthru
      _
    %v71 = vld [vmem:[%s54] sm:$0xf]
    %v72 = vld [vmem:[%s54 + $0x4] sm:$0xf]
    %v73 = vld [vmem:[%s54 + $0x8] sm:$0xf]
    %v74 = vld [vmem:[%s54 + $0xc] sm:$0xf]
    %v75 = vld [vmem:[%s54 + $0x10] sm:$0xf]
    %v76 = vld [vmem:[%s54 + $0x14] sm:$0xf]
    %v77 = vld [vmem:[%s54 + $0x18] sm:$0xf]
    %v78 = vld [vmem:[%s54 + $0x1c] sm:$0xf]
    %v79 = vld [vmem:[%s54 + $0x20] sm:$0xf]
    %v80 = vld [vmem:[%s54 + $0x24] sm:$0xf]
    %v81 = vld [vmem:[%s54 + $0x28] sm:$0xf]
    %v82 = vld [vmem:[%s54 + $0x2c] sm:$0xf]
    %v83 = vld [vmem:[%s54 + $0x30] sm:$0xf]
    %v84 = vld [vmem:[%s54 + $0x34] sm:$0xf]
    %v85 = vld [vmem:[%s54 + $0x38] sm:$0xf]
    %v86 = vld [vmem:[%s54 + $0x3c] sm:$0xf]
    %v87 = vld [vmem:[%s54 + $0x40] sm:$0xf]
    %v88 = vld [vmem:[%s54 + $0x44] sm:$0xf]
    %v89 = vld [vmem:[%s54 + $0x48] sm:$0xf]
    %v90 = vld [vmem:[%s54 + $0x4c] sm:$0xf]
    %v91 = vld [vmem:[%s54 + $0x50] sm:$0xf]
    %v92 = vld [vmem:[%s54 + $0x54] sm:$0xf]
    %v93 = vld [vmem:[%s54 + $0x58] sm:$0xf]
    %v94 = vld [vmem:[%s54 + $0x5c] sm:$0xf]
    %v95 = vld [vmem:[%s54 + $0x60] sm:$0xf]
    %v96 = vld [vmem:[%s54 + $0x64] sm:$0xf]
    %v97 = vld [vmem:[%s54 + $0x68] sm:$0xf]
    %v98 = vld [vmem:[%s54 + $0x6c] sm:$0xf]
    %v99 = vld [vmem:[%s54 + $0x70] sm:$0xf]
    %v100 = vld [vmem:[%s54 + $0x74] sm:$0xf]
    %v101 = vld [vmem:[%s54 + $0x78] sm:$0xf]
    %v102 = vld [vmem:[%s54 + $0x7c] sm:$0xf]
    %v103 = vld [vmem:[%s2] sm:$0xf]
    %v104 = vld [vmem:[%s2 + $0x4] sm:$0xf]
    %v105 = vld [vmem:[%s2 + $0x8] sm:$0xf]
    %v106 = vld [vmem:[%s2 + $0xc] sm:$0xf]
    %v107 = vld [vmem:[%s2 + $0x10] sm:$0xf]
    %v108 = vld [vmem:[%s2 + $0x14] sm:$0xf]
    %v109 = vld [vmem:[%s2 + $0x18] sm:$0xf]
    %v110 = vld [vmem:[%s2 + $0x1c] sm:$0xf]
    %v111 = vld [vmem:[%s3] sm:$0x1]
    %v113 = vlaneseq
    %v114 = vshrl.u32 %v113, 7
    %v115 = vsub.s32 0, %v114
    %v116 = vrot.slane %v111, %v115
    %v150 = vunpack.c.l.b16 %v71
    %v151 = vunpack.c.l.b16 %v72
    %v152 = vunpack.c.l.b16 %v73
    %v153 = vunpack.c.l.b16 %v74
    %v154 = vunpack.c.l.b16 %v75
    %v155 = vunpack.c.l.b16 %v76
    %v156 = vunpack.c.l.b16 %v77
    %v157 = vunpack.c.l.b16 %v78
    %v158 = vunpack.c.l.b16 %v79
    %v159 = vunpack.c.l.b16 %v80
    %v160 = vunpack.c.l.b16 %v81
    %v161 = vunpack.c.l.b16 %v82
    %v162 = vunpack.c.l.b16 %v83
    %v163 = vunpack.c.l.b16 %v84
    %v164 = vunpack.c.l.b16 %v85
    %v165 = vunpack.c.l.b16 %v86
    %v166 = vunpack.c.l.b16 %v87
    %v167 = vunpack.c.l.b16 %v88
    %v168 = vunpack.c.l.b16 %v89
    %v169 = vunpack.c.l.b16 %v90
    %v170 = vunpack.c.l.b16 %v91
    %v171 = vunpack.c.l.b16 %v92
    %v172 = vunpack.c.l.b16 %v93
    %v173 = vunpack.c.l.b16 %v94
    %v174 = vunpack.c.l.b16 %v95
    %v175 = vunpack.c.l.b16 %v96
    %v176 = vunpack.c.l.b16 %v97
    %v177 = vunpack.c.l.b16 %v98
    %v178 = vunpack.c.l.b16 %v99
    %v179 = vunpack.c.l.b16 %v100
    %v180 = vunpack.c.l.b16 %v101
    %v181 = vunpack.c.l.b16 %v102
    %v182 = vpack.c.b16 %v151, %v150
    %v183 = vpack.c.b16 %v153, %v152
    %v184 = vpack.c.b16 %v155, %v154
    %v185 = vpack.c.b16 %v157, %v156
    %v186 = vpack.c.b16 %v159, %v158
    %v187 = vpack.c.b16 %v161, %v160
    %v188 = vpack.c.b16 %v163, %v162
    %v189 = vpack.c.b16 %v165, %v164
    %v190 = vpack.c.b16 %v167, %v166
    %v191 = vpack.c.b16 %v169, %v168
    %v192 = vpack.c.b16 %v171, %v170
    %v193 = vpack.c.b16 %v173, %v172
    %v194 = vpack.c.b16 %v175, %v174
    %v195 = vpack.c.b16 %v177, %v176
    %v196 = vpack.c.b16 %v179, %v178
    %v197 = vpack.c.b16 %v181, %v180
    %v206 = vunpack.c.l.b16 %v103
    %v207 = vunpack.c.l.b16 %v104
    %v208 = vunpack.c.l.b16 %v105
    %v209 = vunpack.c.l.b16 %v106
    %v210 = vunpack.c.l.b16 %v107
    %v211 = vunpack.c.l.b16 %v108
    %v212 = vunpack.c.l.b16 %v109
    %v213 = vunpack.c.l.b16 %v110
    %v214 = vpack.c.b16 %v207, %v206
    %v215 = vpack.c.b16 %v209, %v208
    %v216 = vpack.c.b16 %v211, %v210
    %v217 = vpack.c.b16 %v213, %v212
    %vm222 = vcmask 523264
    %v224 = vsel %vm222, %v182, 0
    %v227 = vsel %vm222, %v183, 0
    %v230 = vsel %vm222, %v184, 0
    %v233 = vsel %vm222, %v185, 0
    %v236 = vsel %vm222, %v186, 0
    %v239 = vsel %vm222, %v187, 0
    %v242 = vsel %vm222, %v188, 0
    %v245 = vsel %vm222, %v189, 0
    %v248 = vsel %vm222, %v190, 0
    %v251 = vsel %vm222, %v191, 0
    %v254 = vsel %vm222, %v192, 0
    %v257 = vsel %vm222, %v193, 0
    %v260 = vsel %vm222, %v194, 0
    %v263 = vsel %vm222, %v195, 0
    %v266 = vsel %vm222, %v196, 0
    %v269 = vsel %vm222, %v197, 0
    %271 = vmatprep.subr.bf16.mxu0 0
    %272 = vmatpush1.bf16.msra.mxu0 0
    %273 = vmatprep.subr.bf16.mxu0 0
    %274 = vmatpush1.bf16.msra.mxu0 0
    %275 = vmatprep.subr.bf16.mxu0 0
    %276 = vmatpush1.bf16.msra.mxu0 0
    %277 = vmatprep.subr.bf16.mxu0 0
    %278 = vmatpush1.bf16.msra.mxu0 0
    %279 = vmatprep.subr.bf16.mxu0 0
    %280 = vmatpush1.bf16.msra.mxu0 %v217
    %281 = vmatprep.subr.bf16.mxu0 0
    %282 = vmatpush1.bf16.msra.mxu0 %v216
    %283 = vmatprep.subr.bf16.mxu0 0
    %284 = vmatpush1.bf16.msra.mxu0 %v215
    %285 = vmatprep.subr.bf16.mxu0 0
    %286 = vmatpush1.bf16.msra.mxu0 %v214
    %287 = vmatprep.subr.bf16.mxu0 0
    %288 = vmatpush2.bf16.msra.mxu0 0
    %289 = vmatprep.subr.bf16.mxu0 0
    %290 = vmatpush2.bf16.msra.mxu0 0
    %291 = vmatprep.subr.bf16.mxu0 0
    %292 = vmatpush2.bf16.msra.mxu0 0
    %293 = vmatprep.subr.bf16.mxu0 0
    %294 = vmatpush2.bf16.msra.mxu0 0
    %295 = vmatprep.subr.bf16.mxu0 0
    %296 = vmatpush2.bf16.msra.mxu0 0
    %297 = vmatprep.subr.bf16.mxu0 0
    %298 = vmatpush2.bf16.msra.mxu0 0
    %299 = vmatprep.subr.bf16.mxu0 0
    %300 = vmatpush2.bf16.msra.mxu0 0
    %301 = vmatprep.subr.bf16.mxu0 0
    %302 = vmatpush2.bf16.msra.mxu0 0
    %303 = vmatprep.mubr.bf16.mxu0 0
    %304 = vmatmul.mubr.bf16.gmra.mxu0 %v224
    %v305 = vpop.f32.mrf.mxu0
    %v306 = vadd.f32 %v116, %v305
    %v307 = vpop.f32.mrf.mxu0
    %v308 = vpop.f32.mrf.mxu0
    %v309 = vadd.f32 %v116, %v308
    %v310 = vpop.f32.mrf.mxu0
    %311 = vmatprep.mubr.bf16.mxu0 0
    %312 = vmatmul.mubr.bf16.gmra.mxu0 %v227
    %v313 = vpop.f32.mrf.mxu0
    %v314 = vadd.f32 %v116, %v313
    %v315 = vpop.f32.mrf.mxu0
    %v316 = vpop.f32.mrf.mxu0
    %v317 = vadd.f32 %v116, %v316
    %v318 = vpop.f32.mrf.mxu0
    %319 = vmatprep.mubr.bf16.mxu0 0
    %320 = vmatmul.mubr.bf16.gmra.mxu0 %v230
    %v321 = vpop.f32.mrf.mxu0
    %v322 = vadd.f32 %v116, %v321
    %v323 = vpop.f32.mrf.mxu0
    %v324 = vpop.f32.mrf.mxu0
    %v325 = vadd.f32 %v116, %v324
    %v326 = vpop.f32.mrf.mxu0
    %327 = vmatprep.mubr.bf16.mxu0 0
    %328 = vmatmul.mubr.bf16.gmra.mxu0 %v233
    %v329 = vpop.f32.mrf.mxu0
    %v330 = vadd.f32 %v116, %v329
    %v331 = vpop.f32.mrf.mxu0
    %v332 = vpop.f32.mrf.mxu0
    %v333 = vadd.f32 %v116, %v332
    %v334 = vpop.f32.mrf.mxu0
    %335 = vmatprep.mubr.bf16.mxu0 0
    %336 = vmatmul.mubr.bf16.gmra.mxu0 %v236
    %v337 = vpop.f32.mrf.mxu0
    %v338 = vadd.f32 %v116, %v337
    %v339 = vpop.f32.mrf.mxu0
    %v340 = vpop.f32.mrf.mxu0
    %v341 = vadd.f32 %v116, %v340
    %v342 = vpop.f32.mrf.mxu0
    %343 = vmatprep.mubr.bf16.mxu0 0
    %344 = vmatmul.mubr.bf16.gmra.mxu0 %v239
    %v345 = vpop.f32.mrf.mxu0
    %v346 = vadd.f32 %v116, %v345
    %v347 = vpop.f32.mrf.mxu0
    %v348 = vpop.f32.mrf.mxu0
    %v349 = vadd.f32 %v116, %v348
    %v350 = vpop.f32.mrf.mxu0
    %351 = vmatprep.mubr.bf16.mxu0 0
    %352 = vmatmul.mubr.bf16.gmra.mxu0 %v242
    %v353 = vpop.f32.mrf.mxu0
    %v354 = vadd.f32 %v116, %v353
    %v355 = vpop.f32.mrf.mxu0
    %v356 = vpop.f32.mrf.mxu0
    %v357 = vadd.f32 %v116, %v356
    %v358 = vpop.f32.mrf.mxu0
    %359 = vmatprep.mubr.bf16.mxu0 0
    %360 = vmatmul.mubr.bf16.gmra.mxu0 %v245
    %v361 = vpop.f32.mrf.mxu0
    %v362 = vadd.f32 %v116, %v361
    %v363 = vpop.f32.mrf.mxu0
    %v364 = vpop.f32.mrf.mxu0
    %v365 = vadd.f32 %v116, %v364
    %v366 = vpop.f32.mrf.mxu0
    %367 = vmatprep.mubr.bf16.mxu0 0
    %368 = vmatmul.mubr.bf16.gmra.mxu0 %v248
    %v369 = vpop.f32.mrf.mxu0
    %v370 = vadd.f32 %v116, %v369
    %v371 = vpop.f32.mrf.mxu0
    %v372 = vpop.f32.mrf.mxu0
    %v373 = vadd.f32 %v116, %v372
    %v374 = vpop.f32.mrf.mxu0
    %375 = vmatprep.mubr.bf16.mxu0 0
    %376 = vmatmul.mubr.bf16.gmra.mxu0 %v251
    %v377 = vpop.f32.mrf.mxu0
    %v378 = vadd.f32 %v116, %v377
    %v379 = vpop.f32.mrf.mxu0
    %v380 = vpop.f32.mrf.mxu0
    %v381 = vadd.f32 %v116, %v380
    %v382 = vpop.f32.mrf.mxu0
    %383 = vmatprep.mubr.bf16.mxu0 0
    %384 = vmatmul.mubr.bf16.gmra.mxu0 %v254
    %v385 = vpop.f32.mrf.mxu0
    %v386 = vadd.f32 %v116, %v385
    %v387 = vpop.f32.mrf.mxu0
    %v388 = vpop.f32.mrf.mxu0
    %v389 = vadd.f32 %v116, %v388
    %v390 = vpop.f32.mrf.mxu0
    %391 = vmatprep.mubr.bf16.mxu0 0
    %392 = vmatmul.mubr.bf16.gmra.mxu0 %v257
    %v393 = vpop.f32.mrf.mxu0
    %v394 = vadd.f32 %v116, %v393
    %v395 = vpop.f32.mrf.mxu0
    %v396 = vpop.f32.mrf.mxu0
    %v397 = vadd.f32 %v116, %v396
    %v398 = vpop.f32.mrf.mxu0
    %399 = vmatprep.mubr.bf16.mxu0 0
    %400 = vmatmul.mubr.bf16.gmra.mxu0 %v260
    %v401 = vpop.f32.mrf.mxu0
    %v402 = vadd.f32 %v116, %v401
    %v403 = vpop.f32.mrf.mxu0
    %v404 = vpop.f32.mrf.mxu0
    %v405 = vadd.f32 %v116, %v404
    %v406 = vpop.f32.mrf.mxu0
    %407 = vmatprep.mubr.bf16.mxu0 0
    %408 = vmatmul.mubr.bf16.gmra.mxu0 %v263
    %v409 = vpop.f32.mrf.mxu0
    %v410 = vadd.f32 %v116, %v409
    %v411 = vpop.f32.mrf.mxu0
    %v412 = vpop.f32.mrf.mxu0
    %v413 = vadd.f32 %v116, %v412
    %v414 = vpop.f32.mrf.mxu0
    %415 = vmatprep.mubr.bf16.mxu0 0
    %416 = vmatmul.mubr.bf16.gmra.mxu0 %v266
    %v417 = vpop.f32.mrf.mxu0
    %v418 = vadd.f32 %v116, %v417
    %v419 = vpop.f32.mrf.mxu0
    %v420 = vpop.f32.mrf.mxu0
    %v421 = vadd.f32 %v116, %v420
    %v422 = vpop.f32.mrf.mxu0
    %423 = vmatprep.mubr.bf16.mxu0 0
    %424 = vmatmul.mubr.bf16.gmra.mxu0 %v269
    %v425 = vpop.f32.mrf.mxu0
    %v426 = vadd.f32 %v116, %v425
    %v427 = vpop.f32.mrf.mxu0
    %v428 = vpop.f32.mrf.mxu0
    %v429 = vadd.f32 %v116, %v428
    %v430 = vpop.f32.mrf.mxu0
    %431 = vdwg.mxu0
    %v432 = vmax.f32 %v306, 0.0
    %v433 = vmax.f32 %v309, 0.0
    %v434 = vmax.f32 %v314, 0.0
    %v435 = vmax.f32 %v317, 0.0
    %v436 = vmax.f32 %v322, 0.0
    %v437 = vmax.f32 %v325, 0.0
    %v438 = vmax.f32 %v330, 0.0
    %v439 = vmax.f32 %v333, 0.0
    %v440 = vmax.f32 %v338, 0.0
    %v441 = vmax.f32 %v341, 0.0
    %v442 = vmax.f32 %v346, 0.0
    %v443 = vmax.f32 %v349, 0.0
    %v444 = vmax.f32 %v354, 0.0
    %v445 = vmax.f32 %v357, 0.0
    %v446 = vmax.f32 %v362, 0.0
    %v447 = vmax.f32 %v365, 0.0
    %v448 = vmax.f32 %v370, 0.0
    %v449 = vmax.f32 %v373, 0.0
    %v450 = vmax.f32 %v378, 0.0
    %v451 = vmax.f32 %v381, 0.0
    %v452 = vmax.f32 %v386, 0.0
    %v453 = vmax.f32 %v389, 0.0
    %v454 = vmax.f32 %v394, 0.0
    %v455 = vmax.f32 %v397, 0.0
    %v456 = vmax.f32 %v402, 0.0
    %v457 = vmax.f32 %v405, 0.0
    %v458 = vmax.f32 %v410, 0.0
    %v459 = vmax.f32 %v413, 0.0
    %v460 = vmax.f32 %v418, 0.0
    %v461 = vmax.f32 %v421, 0.0
    %v462 = vmax.f32 %v426, 0.0
    %v463 = vmax.f32 %v429, 0.0
    %v464 = vld [vmem:[%s4] sm:$0x1]
    %v466 = vlaneseq
    %v467 = vshrl.u32 %v466, 7
    %v468 = vsub.s32 0, %v467
    %v469 = vrot.slane %v464, %v468
    %v471 = vmul.f32 %v432, %v469
    %v472 = vmul.f32 %v433, %v469
    %v473 = vmul.f32 %v434, %v469
    %v474 = vmul.f32 %v435, %v469
    %v475 = vmul.f32 %v436, %v469
    %v476 = vmul.f32 %v437, %v469
    %v477 = vmul.f32 %v438, %v469
    %v478 = vmul.f32 %v439, %v469
    %v479 = vmul.f32 %v440, %v469
    %v480 = vmul.f32 %v441, %v469
    %v481 = vmul.f32 %v442, %v469
    %v482 = vmul.f32 %v443, %v469
    %v483 = vmul.f32 %v444, %v469
    %v484 = vmul.f32 %v445, %v469
    %v485 = vmul.f32 %v446, %v469
    %v486 = vmul.f32 %v447, %v469
    %v487 = vmul.f32 %v448, %v469
    %v488 = vmul.f32 %v449, %v469
    %v489 = vmul.f32 %v450, %v469
    %v490 = vmul.f32 %v451, %v469
    %v491 = vmul.f32 %v452, %v469
    %v492 = vmul.f32 %v453, %v469
    %v493 = vmul.f32 %v454, %v469
    %v494 = vmul.f32 %v455, %v469
    %v495 = vmul.f32 %v456, %v469
    %v496 = vmul.f32 %v457, %v469
    %v497 = vmul.f32 %v458, %v469
    %v498 = vmul.f32 %v459, %v469
    %v499 = vmul.f32 %v460, %v469
    %v500 = vmul.f32 %v461, %v469
    %v501 = vmul.f32 %v462, %v469
    %v502 = vmul.f32 %v463, %v469
    %503 = vadd.xlane.f32.xlu0 %v471
    %v504 = vpop.xlane.xlu0 %503
    %505 = vadd.xlane.f32.xlu0 %v472
    %v506 = vpop.xlane.xlu0 %505
    %507 = vadd.xlane.f32.xlu0 %v473
    %v508 = vpop.xlane.xlu0 %507
    %509 = vadd.xlane.f32.xlu0 %v474
    %v510 = vpop.xlane.xlu0 %509
    %511 = vadd.xlane.f32.xlu0 %v475
    %v512 = vpop.xlane.xlu0 %511
    %513 = vadd.xlane.f32.xlu0 %v476
    %v514 = vpop.xlane.xlu0 %513
    %515 = vadd.xlane.f32.xlu0 %v477
    %v516 = vpop.xlane.xlu0 %515
    %517 = vadd.xlane.f32.xlu0 %v478
    %v518 = vpop.xlane.xlu0 %517
    %519 = vadd.xlane.f32.xlu0 %v479
    %v520 = vpop.xlane.xlu0 %519
    %521 = vadd.xlane.f32.xlu0 %v480
    %v522 = vpop.xlane.xlu0 %521
    %523 = vadd.xlane.f32.xlu0 %v481
    %v524 = vpop.xlane.xlu0 %523
    %525 = vadd.xlane.f32.xlu0 %v482
    %v526 = vpop.xlane.xlu0 %525
    %527 = vadd.xlane.f32.xlu0 %v483
    %v528 = vpop.xlane.xlu0 %527
    %529 = vadd.xlane.f32.xlu0 %v484
    %v530 = vpop.xlane.xlu0 %529
    %531 = vadd.xlane.f32.xlu0 %v485
    %v532 = vpop.xlane.xlu0 %531
    %533 = vadd.xlane.f32.xlu0 %v486
    %v534 = vpop.xlane.xlu0 %533
    %535 = vadd.xlane.f32.xlu0 %v487
    %v536 = vpop.xlane.xlu0 %535
    %537 = vadd.xlane.f32.xlu0 %v488
    %v538 = vpop.xlane.xlu0 %537
    %539 = vadd.xlane.f32.xlu0 %v489
    %v540 = vpop.xlane.xlu0 %539
    %541 = vadd.xlane.f32.xlu0 %v490
    %v542 = vpop.xlane.xlu0 %541
    %543 = vadd.xlane.f32.xlu0 %v491
    %v544 = vpop.xlane.xlu0 %543
    %545 = vadd.xlane.f32.xlu0 %v492
    %v546 = vpop.xlane.xlu0 %545
    %547 = vadd.xlane.f32.xlu0 %v493
    %v548 = vpop.xlane.xlu0 %547
    %549 = vadd.xlane.f32.xlu0 %v494
    %v550 = vpop.xlane.xlu0 %549
    %551 = vadd.xlane.f32.xlu0 %v495
    %v552 = vpop.xlane.xlu0 %551
    %553 = vadd.xlane.f32.xlu0 %v496
    %v554 = vpop.xlane.xlu0 %553
    %555 = vadd.xlane.f32.xlu0 %v497
    %v556 = vpop.xlane.xlu0 %555
    %557 = vadd.xlane.f32.xlu0 %v498
    %v558 = vpop.xlane.xlu0 %557
    %559 = vadd.xlane.f32.xlu0 %v499
    %v560 = vpop.xlane.xlu0 %559
    %561 = vadd.xlane.f32.xlu0 %v500
    %v562 = vpop.xlane.xlu0 %561
    %563 = vadd.xlane.f32.xlu0 %v501
    %v564 = vpop.xlane.xlu0 %563
    %565 = vadd.xlane.f32.xlu0 %v502
    %v566 = vpop.xlane.xlu0 %565
    %v567 = vlaneseq
    %v568 = vand.u32 %v567, 127
    %v569 = vld [vmem:[%s62] sm:$0xff]
    %v570 = vld [vmem:[%s62 + $0x8] sm:$0xff]
    %v571 = vld [vmem:[%s62 + $0x10] sm:$0xff]
    %v572 = vld [vmem:[%s62 + $0x18] sm:$0xff]
    %v573 = vld [vmem:[%s62 + $0x20] sm:$0xff]
    %v574 = vld [vmem:[%s62 + $0x28] sm:$0xff]
    %v575 = vld [vmem:[%s62 + $0x30] sm:$0xff]
    %v576 = vld [vmem:[%s62 + $0x38] sm:$0xff]
    %v577 = vld [vmem:[%s62 + $0x40] sm:$0xff]
    %v578 = vld [vmem:[%s62 + $0x48] sm:$0xff]
    %v579 = vld [vmem:[%s62 + $0x50] sm:$0xff]
    %v580 = vld [vmem:[%s62 + $0x58] sm:$0xff]
    %v581 = vld [vmem:[%s62 + $0x60] sm:$0xff]
    %v582 = vld [vmem:[%s62 + $0x68] sm:$0xff]
    %v583 = vld [vmem:[%s62 + $0x70] sm:$0xff]
    %v584 = vld [vmem:[%s62 + $0x78] sm:$0xff]
    %v585 = vld [vmem:[%s62 + $0x80] sm:$0xff]
    %v586 = vld [vmem:[%s62 + $0x88] sm:$0xff]
    %v587 = vld [vmem:[%s62 + $0x90] sm:$0xff]
    %v588 = vld [vmem:[%s62 + $0x98] sm:$0xff]
    %v589 = vld [vmem:[%s62 + $0xa0] sm:$0xff]
    %v590 = vld [vmem:[%s62 + $0xa8] sm:$0xff]
    %v591 = vld [vmem:[%s62 + $0xb0] sm:$0xff]
    %v592 = vld [vmem:[%s62 + $0xb8] sm:$0xff]
    %v593 = vld [vmem:[%s62 + $0xc0] sm:$0xff]
    %v594 = vld [vmem:[%s62 + $0xc8] sm:$0xff]
    %v595 = vld [vmem:[%s62 + $0xd0] sm:$0xff]
    %v596 = vld [vmem:[%s62 + $0xd8] sm:$0xff]
    %v597 = vld [vmem:[%s62 + $0xe0] sm:$0xff]
    %v598 = vld [vmem:[%s62 + $0xe8] sm:$0xff]
    %v599 = vld [vmem:[%s62 + $0xf0] sm:$0xff]
    %v600 = vld [vmem:[%s62 + $0xf8] sm:$0xff]
    %601 = vset.pattern.permute.xlu0 0
    %602 = vperm.xlu0 %601, %v569
    %v603 = vpop.permute.xlu0 %602
    %604 = vset.pattern.permute.xlu0 0
    %605 = vperm.xlu0 %604, %v570
    %v606 = vpop.permute.xlu0 %605
    %607 = vset.pattern.permute.xlu0 0
    %608 = vperm.xlu0 %607, %v571
    %v609 = vpop.permute.xlu0 %608
    %610 = vset.pattern.permute.xlu0 0
    %611 = vperm.xlu0 %610, %v572
    %v612 = vpop.permute.xlu0 %611
    %613 = vset.pattern.permute.xlu0 0
    %614 = vperm.xlu0 %613, %v573
    %v615 = vpop.permute.xlu0 %614
    %616 = vset.pattern.permute.xlu0 0
    %617 = vperm.xlu0 %616, %v574
    %v618 = vpop.permute.xlu0 %617
    %619 = vset.pattern.permute.xlu0 0
    %620 = vperm.xlu0 %619, %v575
    %v621 = vpop.permute.xlu0 %620
    %622 = vset.pattern.permute.xlu0 0
    %623 = vperm.xlu0 %622, %v576
    %v624 = vpop.permute.xlu0 %623
    %625 = vset.pattern.permute.xlu0 0
    %626 = vperm.xlu0 %625, %v577
    %v627 = vpop.permute.xlu0 %626
    %628 = vset.pattern.permute.xlu0 0
    %629 = vperm.xlu0 %628, %v578
    %v630 = vpop.permute.xlu0 %629
    %631 = vset.pattern.permute.xlu0 0
    %632 = vperm.xlu0 %631, %v579
    %v633 = vpop.permute.xlu0 %632
    %634 = vset.pattern.permute.xlu0 0
    %635 = vperm.xlu0 %634, %v580
    %v636 = vpop.permute.xlu0 %635
    %637 = vset.pattern.permute.xlu0 0
    %638 = vperm.xlu0 %637, %v581
    %v639 = vpop.permute.xlu0 %638
    %640 = vset.pattern.permute.xlu0 0
    %641 = vperm.xlu0 %640, %v582
    %v642 = vpop.permute.xlu0 %641
    %643 = vset.pattern.permute.xlu0 0
    %644 = vperm.xlu0 %643, %v583
    %v645 = vpop.permute.xlu0 %644
    %646 = vset.pattern.permute.xlu0 0
    %647 = vperm.xlu0 %646, %v584
    %v648 = vpop.permute.xlu0 %647
    %649 = vset.pattern.permute.xlu0 0
    %650 = vperm.xlu0 %649, %v585
    %v651 = vpop.permute.xlu0 %650
    %652 = vset.pattern.permute.xlu0 0
    %653 = vperm.xlu0 %652, %v586
    %v654 = vpop.permute.xlu0 %653
    %655 = vset.pattern.permute.xlu0 0
    %656 = vperm.xlu0 %655, %v587
    %v657 = vpop.permute.xlu0 %656
    %658 = vset.pattern.permute.xlu0 0
    %659 = vperm.xlu0 %658, %v588
    %v660 = vpop.permute.xlu0 %659
    %661 = vset.pattern.permute.xlu0 0
    %662 = vperm.xlu0 %661, %v589
    %v663 = vpop.permute.xlu0 %662
    %664 = vset.pattern.permute.xlu0 0
    %665 = vperm.xlu0 %664, %v590
    %v666 = vpop.permute.xlu0 %665
    %667 = vset.pattern.permute.xlu0 0
    %668 = vperm.xlu0 %667, %v591
    %v669 = vpop.permute.xlu0 %668
    %670 = vset.pattern.permute.xlu0 0
    %671 = vperm.xlu0 %670, %v592
    %v672 = vpop.permute.xlu0 %671
    %673 = vset.pattern.permute.xlu0 0
    %674 = vperm.xlu0 %673, %v593
    %v675 = vpop.permute.xlu0 %674
    %676 = vset.pattern.permute.xlu0 0
    %677 = vperm.xlu0 %676, %v594
    %v678 = vpop.permute.xlu0 %677
    %679 = vset.pattern.permute.xlu0 0
    %680 = vperm.xlu0 %679, %v595
    %v681 = vpop.permute.xlu0 %680
    %682 = vset.pattern.permute.xlu0 0
    %683 = vperm.xlu0 %682, %v596
    %v684 = vpop.permute.xlu0 %683
    %685 = vset.pattern.permute.xlu0 0
    %686 = vperm.xlu0 %685, %v597
    %v687 = vpop.permute.xlu0 %686
    %688 = vset.pattern.permute.xlu0 0
    %689 = vperm.xlu0 %688, %v598
    %v690 = vpop.permute.xlu0 %689
    %691 = vset.pattern.permute.xlu0 0
    %692 = vperm.xlu0 %691, %v599
    %v693 = vpop.permute.xlu0 %692
    %694 = vset.pattern.permute.xlu0 0
    %695 = vperm.xlu0 %694, %v600
    %v696 = vpop.permute.xlu0 %695
    %vm697 = vcmp.eq.s32.totalorder %v603, %v568
    %vm698 = vcmp.eq.s32.totalorder %v606, %v568
    %vm699 = vcmp.eq.s32.totalorder %v609, %v568
    %vm700 = vcmp.eq.s32.totalorder %v612, %v568
    %vm701 = vcmp.eq.s32.totalorder %v615, %v568
    %vm702 = vcmp.eq.s32.totalorder %v618, %v568
    %vm703 = vcmp.eq.s32.totalorder %v621, %v568
    %vm704 = vcmp.eq.s32.totalorder %v624, %v568
    %vm705 = vcmp.eq.s32.totalorder %v627, %v568
    %vm706 = vcmp.eq.s32.totalorder %v630, %v568
    %vm707 = vcmp.eq.s32.totalorder %v633, %v568
    %vm708 = vcmp.eq.s32.totalorder %v636, %v568
    %vm709 = vcmp.eq.s32.totalorder %v639, %v568
    %vm710 = vcmp.eq.s32.totalorder %v642, %v568
    %vm711 = vcmp.eq.s32.totalorder %v645, %v568
    %vm712 = vcmp.eq.s32.totalorder %v648, %v568
    %vm713 = vcmp.eq.s32.totalorder %v651, %v568
    %vm714 = vcmp.eq.s32.totalorder %v654, %v568
    %vm715 = vcmp.eq.s32.totalorder %v657, %v568
    %vm716 = vcmp.eq.s32.totalorder %v660, %v568
    %vm717 = vcmp.eq.s32.totalorder %v663, %v568
    %vm718 = vcmp.eq.s32.totalorder %v666, %v568
    %vm719 = vcmp.eq.s32.totalorder %v669, %v568
    %vm720 = vcmp.eq.s32.totalorder %v672, %v568
    %vm721 = vcmp.eq.s32.totalorder %v675, %v568
    %vm722 = vcmp.eq.s32.totalorder %v678, %v568
    %vm723 = vcmp.eq.s32.totalorder %v681, %v568
    %vm724 = vcmp.eq.s32.totalorder %v684, %v568
    %vm725 = vcmp.eq.s32.totalorder %v687, %v568
    %vm726 = vcmp.eq.s32.totalorder %v690, %v568
    %vm727 = vcmp.eq.s32.totalorder %v693, %v568
    %vm728 = vcmp.eq.s32.totalorder %v696, %v568
    %v729 = vsel %vm697, %v504, 0.0
    %v730 = vsel %vm698, %v506, 0.0
    %v731 = vsel %vm699, %v508, 0.0
    %v732 = vsel %vm700, %v510, 0.0
    %v733 = vsel %vm701, %v512, 0.0
    %v734 = vsel %vm702, %v514, 0.0
    %v735 = vsel %vm703, %v516, 0.0
    %v736 = vsel %vm704, %v518, 0.0
    %v737 = vsel %vm705, %v520, 0.0
    %v738 = vsel %vm706, %v522, 0.0
    %v739 = vsel %vm707, %v524, 0.0
    %v740 = vsel %vm708, %v526, 0.0
    %v741 = vsel %vm709, %v528, 0.0
    %v742 = vsel %vm710, %v530, 0.0
    %v743 = vsel %vm711, %v532, 0.0
    %v744 = vsel %vm712, %v534, 0.0
    %v745 = vsel %vm713, %v536, 0.0
    %v746 = vsel %vm714, %v538, 0.0
    %v747 = vsel %vm715, %v540, 0.0
    %v748 = vsel %vm716, %v542, 0.0
    %v749 = vsel %vm717, %v544, 0.0
    %v750 = vsel %vm718, %v546, 0.0
    %v751 = vsel %vm719, %v548, 0.0
    %v752 = vsel %vm720, %v550, 0.0
    %v753 = vsel %vm721, %v552, 0.0
    %v754 = vsel %vm722, %v554, 0.0
    %v755 = vsel %vm723, %v556, 0.0
    %v756 = vsel %vm724, %v558, 0.0
    %v757 = vsel %vm725, %v560, 0.0
    %v758 = vsel %vm726, %v562, 0.0
    %v759 = vsel %vm727, %v564, 0.0
    %v760 = vsel %vm728, %v566, 0.0
    %v761 = vadd.f32 %v729, %v730
    %v762 = vadd.f32 %v761, %v731
    %v763 = vadd.f32 %v762, %v732
    %v764 = vadd.f32 %v763, %v733
    %v765 = vadd.f32 %v764, %v734
    %v766 = vadd.f32 %v765, %v735
    %v767 = vadd.f32 %v766, %v736
    %v768 = vadd.f32 %v767, %v737
    %v769 = vadd.f32 %v768, %v738
    %v770 = vadd.f32 %v769, %v739
    %v771 = vadd.f32 %v770, %v740
    %v772 = vadd.f32 %v771, %v741
    %v773 = vadd.f32 %v772, %v742
    %v774 = vadd.f32 %v773, %v743
    %v775 = vadd.f32 %v774, %v744
    %v776 = vadd.f32 %v775, %v745
    %v777 = vadd.f32 %v776, %v746
    %v778 = vadd.f32 %v777, %v747
    %v779 = vadd.f32 %v778, %v748
    %v780 = vadd.f32 %v779, %v749
    %v781 = vadd.f32 %v780, %v750
    %v782 = vadd.f32 %v781, %v751
    %v783 = vadd.f32 %v782, %v752
    %v784 = vadd.f32 %v783, %v753
    %v785 = vadd.f32 %v784, %v754
    %v786 = vadd.f32 %v785, %v755
    %v787 = vadd.f32 %v786, %v756
    %v788 = vadd.f32 %v787, %v757
    %v789 = vadd.f32 %v788, %v758
    %v790 = vadd.f32 %v789, %v759
    %v791 = vadd.f32 %v790, %v760
    %v792 = vrot.slane %v791, 4
    %v793 = vadd.f32 %v791, %v792
    %v794 = vrot.slane %v793, 2
    %v795 = vadd.f32 %v793, %v794
    %v796 = vrot.slane %v795, 1
    %v797 = vadd.f32 %v795, %v796
    %v798 = vld [vmem:[#allocation2] sm:$0x1]
    %v799 = vadd.f32 %v798, %v797
    %800 = vst [vmem:[#allocation2] sm:$0x1] %v799
    // Predicated region
    $region26: #{tpu_custom_call.1} parent=1 // pred_check
      _
    $region27: #{tpu_custom_call.1} parent=1 // pred_check_branch
      %802 = sbr.rel (0) target = $region29
    $region28: #{tpu_custom_call.1} parent=1 // pred_region
      %s804 = ssub.s32 128, 128
      %805 = vsyncadd [#allocation3], %s804
      %s807 = sshll.u32 [#allocation2], 4
      %s808 = int_to_ptr.vmem [resolvable:$true] %s807
      %810 = dma.vmem_to_hbm [thread:$0]  %s808, 128, %s5, [#allocation3]
    $region29: #{tpu_custom_call.1} parent=1 // pred_fallthru
      _
    // Predicated region
    $region30: #{tpu_custom_call.1} parent=1 // pred_check
      _
    $region31: #{tpu_custom_call.1} parent=1 // pred_check_branch
      %812 = sbr.rel (0) target = $region33
    $region32: #{tpu_custom_call.1} parent=1 // pred_region
      %813 = dma.done [#allocation3], 128
    $region33: #{tpu_custom_call.1} parent=1 // pred_fallthru
      _
    %814 = vsyncpa [#allocation3], 1

</llo_original>
